<compile_context>
chip_gen: v5e
topology: v5e:2x2
jax: 0.10.0
libtpu: 0.0.40
codegen_flags: <defaults>
</compile_context>

<pallas_src>
import functools

import jax
import jax.numpy as jnp
from jax.experimental import pallas as pl
from jax.experimental.pallas import tpu as pltpu


def value_net_kernel(x_ref, w1_ref, w2_ref, consts_ref, b3_ref, o_ref):
    x = x_ref[...]                       # (tm, state_dim)
    consts = consts_ref[...]             # (3, hidden): [b1; b2; w3_row]
    b1 = consts[0:1, :]
    b2 = consts[1:2, :]
    w3 = consts[2:3, :]

    # linear1 + ReLU  (MXU matmul, f32 accumulate; bias/ReLU on the VPU in f32)
    h1 = jnp.dot(x, w1_ref[...], preferred_element_type=jnp.float32)
    h1 = jnp.maximum(h1 + b1, 0.0)
    # linear2 + ReLU
    h2 = jnp.dot(h1, w2_ref[...], preferred_element_type=jnp.float32)
    h2 = jnp.maximum(h2 + b2, 0.0)

    # linear3 (out_features = 1): NT matmul  (1, hidden) x (tm, hidden)^T
    # -> (1, tm).  Produces the lane-dense output row directly.
    o = jax.lax.dot_general(
        w3, h2,
        dimension_numbers=(((1,), (1,)), ((), ())),
        preferred_element_type=jnp.float32)
    # b3 comes from SMEM (scalar read is free); store one unmasked lane-dense row.
    o_ref[...] = (o + b3_ref[0, 0]).astype(o_ref.dtype)


def _round_up(x, m):
    return (x + m - 1) // m * m


def _cdiv(a, b):
    return -(-a // b)


@functools.partial(jax.jit, static_argnames=("tm",))
def value_network_forward(state, w1, b1, w2, b2, w3, b3, *, tm=4096):
    batch, state_dim = state.shape
    hidden = w1.shape[1]

    # --- batch-tile selection -------------------------------------------
    # Rows per grid step: multiple of 8 (sublane), capped at tm and at the
    # (rounded-up) batch.  Large tiles amortize the ~0.35 us per-step cost.
    tm_eff = min(max(8, _round_up(tm, 8)), _round_up(batch, 8))
    num_tiles = _cdiv(batch, tm_eff)
    # v7x megacore: keep at least 2 grid steps for large batches so the
    # "parallel" batch axis can occupy both TensorCores.  Harmless on v5e/v6e.
    if num_tiles == 1 and batch >= 1024:
        tm_eff = _round_up(_cdiv(batch, 2), 8)
        num_tiles = _cdiv(batch, tm_eff)

    # Pack the three (1, hidden) constants into one resident VMEM block.
    consts = jnp.concatenate([b1, b2, w3.reshape(1, hidden)], axis=0)
    b3_smem = b3.reshape(1, 1)

    flops = 2 * batch * (state_dim * hidden + hidden * hidden + hidden)
    bytes_accessed = (batch * state_dim * 4
                      + int(w1.size + w2.size + consts.size + 1) * 4
                      + batch * 4)

    out = pl.pallas_call(
        value_net_kernel,
        # Lane-dense output: one (1, tm_eff) row per grid step.
        out_shape=jax.ShapeDtypeStruct((num_tiles, 1, tm_eff), jnp.float32),
        grid=(num_tiles,),
        in_specs=[
            # Streaming state tiles (last tile may be partial; tail rows are
            # garbage, never mixed across rows, and sliced off below).
            pl.BlockSpec((tm_eff, state_dim), lambda i: (i, 0)),
            # Weights / packed constants: constant block index -> VMEM-resident.
            pl.BlockSpec((state_dim, hidden), lambda i: (0, 0)),
            pl.BlockSpec((hidden, hidden), lambda i: (0, 0)),
            pl.BlockSpec((3, hidden), lambda i: (0, 0)),
            # Output bias: single scalar, lives in SMEM.
            pl.BlockSpec(memory_space=pltpu.MemorySpace.SMEM),
        ],
        out_specs=pl.BlockSpec((None, 1, tm_eff), lambda i: (i, 0, 0)),
        compiler_params=pltpu.CompilerParams(
            dimension_semantics=("parallel",)),
        cost_estimate=pl.CostEstimate(
            flops=flops, transcendentals=0, bytes_accessed=bytes_accessed),
    )(state, w1, w2, consts, b3_smem)

    # (num_tiles, 1, tm_eff) rows are contiguous batch chunks; flatten and
    # drop the (tiny) tail padding.
    return out.reshape(-1, 1)[:batch]


def xavier_uniform(key, fan_in, fan_out, gain=1.0):
    # Matches torch.nn.init.xavier_uniform_ (gain=1): U(-a, a),
    # a = gain * sqrt(6 / (fan_in + fan_out)).  Stored (fan_in, fan_out)
    # so forward is x @ W.
    bound = gain * jnp.sqrt(6.0 / (fan_in + fan_out))
    return jax.random.uniform(key, (fan_in, fan_out), jnp.float32,
                              minval=-bound, maxval=bound)


def init_value_network(key, state_dim, hidden_dim):
    k1, k2, k3 = jax.random.split(key, 3)
    w1 = xavier_uniform(k1, state_dim, hidden_dim)
    b1 = jnp.zeros((1, hidden_dim), jnp.float32)
    w2 = xavier_uniform(k2, hidden_dim, hidden_dim)
    b2 = jnp.zeros((1, hidden_dim), jnp.float32)
    w3 = xavier_uniform(k3, hidden_dim, 1)
    b3 = jnp.zeros((1, 1), jnp.float32)
    return w1, b1, w2, b2, w3, b3


def reference_forward(state, w1, b1, w2, b2, w3, b3):
    x = jnp.maximum(state @ w1 + b1, 0.0)
    x = jnp.maximum(x @ w2 + b2, 0.0)
    return x @ w3 + b3


if __name__ == "__main__":
    key = jax.random.PRNGKey(0)
    k1, k2, k3, kp = jax.random.split(key, 4)

    state_dim, hidden_dim = 16, 32
    params = init_value_network(kp, state_dim, hidden_dim)

    # 1) Small single-tile case (matches typical SAC usage).
    s1 = jax.random.normal(k1, (8, state_dim), jnp.float32)
    o1 = jax.block_until_ready(value_network_forward(s1, *params))
    r1 = reference_forward(s1, *params)
    assert o1.shape == (8, 1), o1.shape
    assert jnp.allclose(o1, r1, atol=1e-5, rtol=1e-5), (
        f"max abs err {jnp.max(jnp.abs(o1 - r1))}")

    # 2) Multi-tile with a partial last tile (40 rows, 16 per tile) —
    #    exercises grid > 1 with no wrapper-side padding.
    s2 = jax.random.normal(k2, (40, state_dim), jnp.float32)
    o2 = jax.block_until_ready(value_network_forward(s2, *params, tm=16))
    r2 = reference_forward(s2, *params)
    assert o2.shape == (40, 1), o2.shape
    assert jnp.allclose(o2, r2, atol=1e-5, rtol=1e-5), (
        f"max abs err {jnp.max(jnp.abs(o2 - r2))}")

    # 3) Larger batch — exercises the >=2-tile split for v7x megacore.
    s3 = jax.random.normal(k3, (1536, state_dim), jnp.float32)
    o3 = jax.block_until_ready(value_network_forward(s3, *params))
    r3 = reference_forward(s3, *params)
    assert o3.shape == (1536, 1), o3.shape
    assert jnp.allclose(o3, r3, atol=1e-5, rtol=1e-5), (
        f"max abs err {jnp.max(jnp.abs(o3 - r3))}")

    print("KERNEL_OK")
</pallas_src>

<mosaic_0001>
module attributes {stable_mosaic.version = 11 : i64} {
  func.func @value_net_kernel(%arg0: i32, %arg1: memref<8x16xf32, #tpu.memory_space<vmem>>, %arg2: memref<16x32xf32, #tpu.memory_space<vmem>>, %arg3: memref<32x32xf32, #tpu.memory_space<vmem>>, %arg4: memref<3x32xf32, #tpu.memory_space<vmem>>, %arg5: memref<1x1xf32, #tpu.memory_space<smem>>, %arg6: memref<1x1x8xf32, #tpu.memory_space<vmem>>) attributes {dimension_semantics = [#tpu.dimension_semantics<parallel>], iteration_bounds = array<i64: 1>, scalar_prefetch = 0 : i64, scratch_operands = 0 : i64, tpu.core_type = #tpu.core_type<tc>, window_params = [{transform_indices = @transform_0, window_bounds = array<i64: 8, 16>}, {pipeline_mode = #tpu.pipeline_mode<synchronous>, transform_indices = @transform_1, window_bounds = array<i64: 16, 32>}, {pipeline_mode = #tpu.pipeline_mode<synchronous>, transform_indices = @transform_2, window_bounds = array<i64: 32, 32>}, {pipeline_mode = #tpu.pipeline_mode<synchronous>, transform_indices = @transform_3, window_bounds = array<i64: 3, 32>}, {transform_indices = @transform_4, window_bounds = array<i64: 1, 1>}, {transform_indices = @transform_5, window_bounds = array<i64: 1, 1, 8>}]} {
    %c0 = arith.constant 0 : index
    %c0_0 = arith.constant 0 : index
    %0 = vector.load %arg1[%c0, %c0_0] : memref<8x16xf32, #tpu.memory_space<vmem>>, vector<8x16xf32>
    %c0_1 = arith.constant 0 : index
    %c0_2 = arith.constant 0 : index
    %1 = vector.load %arg4[%c0_1, %c0_2] : memref<3x32xf32, #tpu.memory_space<vmem>>, vector<3x32xf32>
    %2 = vector.extract_strided_slice %1 {offsets = [0, 0], sizes = [1, 32], strides = [1, 1]} : vector<3x32xf32> to vector<1x32xf32>
    %3 = vector.extract_strided_slice %1 {offsets = [1, 0], sizes = [1, 32], strides = [1, 1]} : vector<3x32xf32> to vector<1x32xf32>
    %4 = vector.extract_strided_slice %1 {offsets = [2, 0], sizes = [1, 32], strides = [1, 1]} : vector<3x32xf32> to vector<1x32xf32>
    %c0_3 = arith.constant 0 : index
    %c0_4 = arith.constant 0 : index
    %5 = vector.load %arg2[%c0_3, %c0_4] : memref<16x32xf32, #tpu.memory_space<vmem>>, vector<16x32xf32>
    %cst = arith.constant dense<0.000000e+00> : vector<8x32xf32>
    %6 = tpu.matmul %0, %5, %cst {dimension_numbers = #tpu.dot_dimension_numbers<[1], [0], [0], [1], [0, 0, 1, 1], [], []>} : vector<8x16xf32>, vector<16x32xf32>, vector<8x32xf32> -> vector<8x32xf32>
    %7 = vector.broadcast %2 : vector<1x32xf32> to vector<8x32xf32>
    %8 = arith.addf %6, %7 : vector<8x32xf32>
    %cst_5 = arith.constant 0.000000e+00 : f32
    %9 = vector.broadcast %cst_5 : f32 to vector<8x32xf32>
    %10 = arith.maximumf %8, %9 : vector<8x32xf32>
    %c0_6 = arith.constant 0 : index
    %c0_7 = arith.constant 0 : index
    %11 = vector.load %arg3[%c0_6, %c0_7] : memref<32x32xf32, #tpu.memory_space<vmem>>, vector<32x32xf32>
    %cst_8 = arith.constant dense<0.000000e+00> : vector<8x32xf32>
    %12 = tpu.matmul %10, %11, %cst_8 {dimension_numbers = #tpu.dot_dimension_numbers<[1], [0], [0], [1], [0, 0, 1, 1], [], []>} : vector<8x32xf32>, vector<32x32xf32>, vector<8x32xf32> -> vector<8x32xf32>
    %13 = vector.broadcast %3 : vector<1x32xf32> to vector<8x32xf32>
    %14 = arith.addf %12, %13 : vector<8x32xf32>
    %cst_9 = arith.constant 0.000000e+00 : f32
    %15 = vector.broadcast %cst_9 : f32 to vector<8x32xf32>
    %16 = arith.maximumf %14, %15 : vector<8x32xf32>
    %cst_10 = arith.constant dense<0.000000e+00> : vector<1x8xf32>
    %17 = tpu.matmul %4, %16, %cst_10 {dimension_numbers = #tpu.dot_dimension_numbers<[1], [1], [0], [0], [0, 0, 1, 0], [], []>} : vector<1x32xf32>, vector<8x32xf32>, vector<1x8xf32> -> vector<1x8xf32>
    %c0_11 = arith.constant 0 : index
    %c0_12 = arith.constant 0 : index
    %18 = memref.load %arg5[%c0_11, %c0_12] : memref<1x1xf32, #tpu.memory_space<smem>>
    %19 = vector.broadcast %18 : f32 to vector<1x8xf32>
    %20 = arith.addf %17, %19 : vector<1x8xf32>
    %c0_13 = arith.constant 0 : index
    %c0_14 = arith.constant 0 : index
    %c0_15 = arith.constant 0 : index
    %21 = vector.load %arg6[%c0_13, %c0_14, %c0_15] : memref<1x1x8xf32, #tpu.memory_space<vmem>>, vector<1x1x8xf32>
    %22 = vector.shape_cast %21 : vector<1x1x8xf32> to vector<1x8xf32>
    %23 = vector.shape_cast %20 : vector<1x8xf32> to vector<1x1x8xf32>
    tpu.vector_store %arg6[%c0_13, %c0_14, %c0_15], %23 {strides = array<i32>} : memref<1x1x8xf32, #tpu.memory_space<vmem>>, vector<1x1x8xf32>,
    return
  }
  func.func @transform_0(%arg0: i32) -> (i32, i32) {
    %c0_i32 = arith.constant 0 : i32
    %c0_i32_0 = arith.constant 0 : i32
    return %arg0, %c0_i32 : i32, i32
  }
  func.func @transform_1(%arg0: i32) -> (i32, i32) {
    %c0_i32 = arith.constant 0 : i32
    %c0_i32_0 = arith.constant 0 : i32
    %c0_i32_1 = arith.constant 0 : i32
    return %c0_i32, %c0_i32_0 : i32, i32
  }
  func.func @transform_2(%arg0: i32) -> (i32, i32) {
    %c0_i32 = arith.constant 0 : i32
    %c0_i32_0 = arith.constant 0 : i32
    %c0_i32_1 = arith.constant 0 : i32
    return %c0_i32, %c0_i32_0 : i32, i32
  }
  func.func @transform_3(%arg0: i32) -> (i32, i32) {
    %c0_i32 = arith.constant 0 : i32
    %c0_i32_0 = arith.constant 0 : i32
    %c0_i32_1 = arith.constant 0 : i32
    return %c0_i32, %c0_i32_0 : i32, i32
  }
  func.func @transform_4(%arg0: i32) -> (i32, i32) {
    %c0_i32 = arith.constant 0 : i32
    %c0_i32_0 = arith.constant 0 : i32
    %c0_i32_1 = arith.constant 0 : i32
    return %c0_i32, %c0_i32_0 : i32, i32
  }
  func.func @transform_5(%arg0: i32) -> (i32, i32, i32) {
    %c0_i32 = arith.constant 0 : i32
    %c0_i32_0 = arith.constant 0 : i32
    %c0_i32_1 = arith.constant 0 : i32
    return %arg0, %c0_i32, %c0_i32_0 : i32, i32, i32
  }
}

</mosaic_0001>

<llo_original>
// kernel: value_network_forward.1
$region0: #{value_network_forward.1}
  #allocation0 [shape = 'u32[]', space=smem, size = 0x4, offset = 0x4, fixed_abs, tag = 'smem constant byte address 0x4 - core index']
  #allocation1 [shape = 'u32[72,128]{1,0:T(1,128)}', space=vmem, size = 0x9000, scoped, tag = 'internal scratch']
  #allocation2 [shape = 'f32[1,1]{1,0:T(1,128)S(6)}', space=smem, size = 0x200, scoped, tag = 'scoped memory for value_network_forward.1']
  %s0 = inlined_call_operand.vmem [shape: f32[8,16], index: 0, kind: input, shape index: {}]
  %s1 = inlined_call_operand.hbm [shape: f32[16,32], index: 1, kind: input, shape index: {}]
  %s2 = inlined_call_operand.hbm [shape: f32[32,32], index: 2, kind: input, shape index: {}]
  %s3 = inlined_call_operand.vmem [shape: f32[3,32], index: 3, kind: input, shape index: {}]
  %s4 = inlined_call_operand.<no memory space> [shape: f32[1,1], index: 4, kind: input, shape index: {}]
  %s5 = inlined_call_operand.hbm [shape: f32[1,1,8], index: 5, kind: output, shape index: {}]
  %s6 = sld [smem:[#allocation0]]
  $region38: #{value_network_forward.1} parent=0
    _
  %s8 = ssub.s32 1, %s6
  %s9 = scalar_select 0, %s8, %s6
  %10 = sst [smem:[#allocation2]] %s4
  $region1: #{value_network_forward.1} parent=0
    #allocation3 [shape = 'u8[8192]{0}', space=vmem, size = 0x2000, scoped, tag = 'input window, operand 1, single buffered']
    #allocation4 [shape = 's32[1]{0}', space=sflag, size = 0x4, scoped, tag = 'scoped memory for value_network_forward.1']
    #allocation5 [shape = 's32[1]{0}', space=sflag, size = 0x4, scoped, tag = 'scoped memory for value_network_forward.1']
    #allocation6 [shape = 'u8[16384]{0}', space=vmem, size = 0x4000, scoped, tag = 'input window, operand 2, single buffered']
    #allocation7 [shape = 's32[1]{0}', space=sflag, size = 0x4, scoped, tag = 'scoped memory for value_network_forward.1']
    #allocation8 [shape = 'u8[512]{0}', space=vmem, size = 0x400, scoped, tag = 'output window, operand 0, single buffered']
    %11 = vsyncpa [#allocation4], 0
    %12 = vsyncpa [#allocation7], 0
    %13 = vsyncpa [#allocation5], 0
    // Predicated region
    $region2: #{value_network_forward.1} parent=1 // pred_check
      _
    $region3: #{value_network_forward.1} parent=1 // pred_check_branch
      %15 = sbr.rel (0) target = $region5
    $region4: #{value_network_forward.1} parent=1 // pred_region
      _
    $region5: #{value_network_forward.1} parent=1 // pred_fallthru
      _
    // Predicated region
    $region6: #{value_network_forward.1} parent=1 // pred_check
      _
    $region7: #{value_network_forward.1} parent=1 // pred_check_branch
      %17 = sbr.rel (0) target = $region9
    $region8: #{value_network_forward.1} parent=1 // pred_region
      %19 = vsyncadd [#allocation4], 0
      %s20 = sshll.u32 %s1, 4
      %s21 = int_to_ptr.hbm [resolvable:$true] %s20
      %s22 = sshll.u32 [#allocation3], 4
      %s23 = int_to_ptr.vmem [resolvable:$true] %s22
      %28 = dma.hbm_to_vmem [thread:$0]  %s21, 256, %s23, [#allocation4], 128, 128, 8
    $region9: #{value_network_forward.1} parent=1 // pred_fallthru
      _
    // Predicated region
    $region10: #{value_network_forward.1} parent=1 // pred_check
      _
    $region11: #{value_network_forward.1} parent=1 // pred_check_branch
      %30 = sbr.rel (0) target = $region13
    $region12: #{value_network_forward.1} parent=1 // pred_region
      %32 = vsyncadd [#allocation7], 0
      %s33 = sshll.u32 %s2, 4
      %s34 = int_to_ptr.hbm [resolvable:$true] %s33
      %s35 = sshll.u32 [#allocation6], 4
      %s36 = int_to_ptr.vmem [resolvable:$true] %s35
      %41 = dma.hbm_to_vmem [thread:$0]  %s34, 512, %s36, [#allocation7], 128, 128, 8
    $region13: #{value_network_forward.1} parent=1 // pred_fallthru
      _
    // Predicated region
    $region14: #{value_network_forward.1} parent=1 // pred_check
      _
    $region15: #{value_network_forward.1} parent=1 // pred_check_branch
      %43 = sbr.rel (0) target = $region17
    $region16: #{value_network_forward.1} parent=1 // pred_region
      _
    $region17: #{value_network_forward.1} parent=1 // pred_fallthru
      _
    // Predicated region
    $region18: #{value_network_forward.1} parent=1 // pred_check
      _
    $region19: #{value_network_forward.1} parent=1 // pred_check_branch
      %45 = sbr.rel (0) target = $region21
    $region20: #{value_network_forward.1} parent=1 // pred_region
      _
    $region21: #{value_network_forward.1} parent=1 // pred_fallthru
      _
    // Predicated region
    $region22: #{value_network_forward.1} parent=1 // pred_check
      _
    $region23: #{value_network_forward.1} parent=1 // pred_check_branch
      %47 = sbr.rel (0) target = $region25
    $region24: #{value_network_forward.1} parent=1 // pred_region
      %49 = dma.done [#allocation4], 256
    $region25: #{value_network_forward.1} parent=1 // pred_fallthru
      _
    // Predicated region
    $region26: #{value_network_forward.1} parent=1 // pred_check
      _
    $region27: #{value_network_forward.1} parent=1 // pred_check_branch
      %51 = sbr.rel (0) target = $region29
    $region28: #{value_network_forward.1} parent=1 // pred_region
      %53 = dma.done [#allocation7], 512
    $region29: #{value_network_forward.1} parent=1 // pred_fallthru
      _
    %v54 = vld [vmem:[%s0] sm:$0xff]
    %v55 = vld [vmem:[%s3] sm:$0x7]
    %v56 = vld [vmem:[#allocation3] sm:$0xff]
    %v57 = vld [vmem:[#allocation3 + $0x8] sm:$0xff]
    %v58 = vperm.slane %v55, 0
    %vm59 = vcmask 130048
    %v61 = vsel %vm59, %v54, 0
    %63 = vmatpush.msra.mxu0 0.0
    %64 = vmatpush.msra.mxu0 0.0
    %65 = vmatpush.msra.mxu0 0.0
    %66 = vmatpush.msra.mxu0 0.0
    %67 = vmatpush.msra.mxu0 0.0
    %68 = vmatpush.msra.mxu0 0.0
    %69 = vmatpush.msra.mxu0 0.0
    %70 = vmatpush.msra.mxu0 0.0
    %71 = vmatpush.msra.mxu0 0.0
    %72 = vmatpush.msra.mxu0 0.0
    %73 = vmatpush.msra.mxu0 0.0
    %74 = vmatpush.msra.mxu0 0.0
    %75 = vmatpush.msra.mxu0 0.0
    %76 = vmatpush.msra.mxu0 0.0
    %77 = vmatpush.msra.mxu0 %v57
    %78 = vmatpush.msra.mxu0 %v56
    %79 = vmatmul.f32.gmra.mxu0 %v61
    %v80 = vpop.f32.mrf.mxu0
    %v81 = vadd.f32 %v58, %v80
    %82 = vdwg.mxu0
    %v83 = vmax.f32 %v81, 0.0
    %v84 = vld [vmem:[#allocation6] sm:$0xff]
    %v85 = vld [vmem:[#allocation6 + $0x8] sm:$0xff]
    %v86 = vld [vmem:[#allocation6 + $0x10] sm:$0xff]
    %v87 = vld [vmem:[#allocation6 + $0x18] sm:$0xff]
    %v88 = vperm.slane %v55, 1
    %vm89 = vcmask 261120
    %v91 = vsel %vm89, %v83, 0
    %93 = vmatpush.msra.mxu0 0.0
    %94 = vmatpush.msra.mxu0 0.0
    %95 = vmatpush.msra.mxu0 0.0
    %96 = vmatpush.msra.mxu0 0.0
    %97 = vmatpush.msra.mxu0 0.0
    %98 = vmatpush.msra.mxu0 0.0
    %99 = vmatpush.msra.mxu0 0.0
    %100 = vmatpush.msra.mxu0 0.0
    %101 = vmatpush.msra.mxu0 0.0
    %102 = vmatpush.msra.mxu0 0.0
    %103 = vmatpush.msra.mxu0 0.0
    %104 = vmatpush.msra.mxu0 0.0
    %105 = vmatpush.msra.mxu0 %v87
    %106 = vmatpush.msra.mxu0 %v86
    %107 = vmatpush.msra.mxu0 %v85
    %108 = vmatpush.msra.mxu0 %v84
    %109 = vmatmul.f32.gmra.mxu0 %v91
    %v110 = vpop.f32.mrf.mxu0
    %v111 = vadd.f32 %v88, %v110
    %112 = vdwg.mxu0
    %v113 = vmax.f32 %v111, 0.0
    %s114 = sld [smem:[#allocation2]]
    %v115 = vstv %s114
    %v117 = vrot.slane %v55, 2
    %v118 = vsel %vm89, %v117, 0
    %v121 = vsel %vm89, %v113, 0
    %123 = vmatpush.xpose.msra.mxu0 0.0
    %124 = vmatpush.xpose.msra.mxu0 0.0
    %125 = vmatpush.xpose.msra.mxu0 0.0
    %126 = vmatpush.xpose.msra.mxu0 0.0
    %127 = vmatpush.xpose.msra.mxu0 0.0
    %128 = vmatpush.xpose.msra.mxu0 0.0
    %129 = vmatpush.xpose.msra.mxu0 0.0
    %130 = vmatpush.xpose.msra.mxu0 0.0
    %131 = vmatpush.xpose.msra.mxu0 0.0
    %132 = vmatpush.xpose.msra.mxu0 0.0
    %133 = vmatpush.xpose.msra.mxu0 0.0
    %134 = vmatpush.xpose.msra.mxu0 0.0
    %135 = vmatpush.xpose.msra.mxu0 0.0
    %136 = vmatpush.xpose.msra.mxu0 0.0
    %137 = vmatpush.xpose.msra.mxu0 0.0
    %138 = vmatpush.xpose.msra.mxu0 %v121
    %139 = vmatmul.f32.gmra.mxu0 %v118
    %v140 = vpop.f32.mrf.mxu0
    %v141 = vadd.f32 %v115, %v140
    %142 = vdwg.mxu0
    %vm143 = vcmask 57344
    %144 = vst.msk [vmem:[#allocation8] sm:$0x1] %vm143, %v141
    // Predicated region
    $region30: #{value_network_forward.1} parent=1 // pred_check
      _
    $region31: #{value_network_forward.1} parent=1 // pred_check_branch
      %146 = sbr.rel (0) target = $region33
    $region32: #{value_network_forward.1} parent=1 // pred_region
      %148 = vsyncadd [#allocation5], 0
      %s150 = sshll.u32 [#allocation8], 4
      %s151 = int_to_ptr.vmem [resolvable:$true] %s150
      %s152 = sshll.u32 %s5, 4
      %s153 = int_to_ptr.hbm [resolvable:$true] %s152
      %155 = dma.vmem_to_hbm [thread:$0]  %s151, 16, %s153, [#allocation5]
    $region33: #{value_network_forward.1} parent=1 // pred_fallthru
      _
    // Predicated region
    $region34: #{value_network_forward.1} parent=1 // pred_check
      _
    $region35: #{value_network_forward.1} parent=1 // pred_check_branch
      %157 = sbr.rel (0) target = $region37
    $region36: #{value_network_forward.1} parent=1 // pred_region
      %159 = dma.done [#allocation5], 16
    $region37: #{value_network_forward.1} parent=1 // pred_fallthru
      _
    %160 = vsyncpa [#allocation4], 1
    %161 = vsyncpa [#allocation7], 1
    %162 = vsyncpa [#allocation5], 1

</llo_original>
